<compile_context>
chip_gen: v6e
topology: v6e:2x2x1
jax: 0.10.0
libtpu: 0.0.40
codegen_flags: <defaults>
</compile_context>

<pallas_src>
import jax
import jax.numpy as jnp
from jax.experimental import pallas as pl
from jax.experimental.pallas import tpu as pltpu

IN_FEATURES = 120
OUT_FEATURES = 84


def _round_up(x, m):
    return ((x + m - 1) // m) * m


def f4_kernel(x_ref, w_ref, b_ref, o_ref):
    # MXU matmul (works for f32 or bf16 inputs) with f32 accumulation;
    # bias add + ReLU on the VPU in f32.
    acc = jnp.dot(x_ref[...], w_ref[...], preferred_element_type=jnp.float32)
    acc = acc + b_ref[...].astype(jnp.float32)
    o_ref[...] = jnp.maximum(acc, 0.0).astype(o_ref.dtype)


def _choose_batch_tile(batch, block_b):
    # Multiple of 8 sublanes, capped at block_b.
    tb = min(block_b, _round_up(batch, 8))
    # For mid/large batches make sure the grid has >= 2 steps so v7x's two
    # TensorCores both get work (per-step overhead is noise at this size;
    # harmless on single-TC v5e/v6e).
    if batch >= 128:
        tb = min(tb, _round_up(-(-batch // 2), 8))
    return tb


def f4_forward(x, w, b, *, block_b=2048):
    """x: (B, 120) f32/bf16, w: (120, 84) f32/bf16, b: (84,) f32 -> (B, 84) f32."""
    B, K = x.shape
    K_w, N = w.shape
    assert K == K_w, (K, K_w)

    tb = _choose_batch_tile(B, block_b)
    grid = (pl.cdiv(B, tb),)

    b2d = b.reshape(1, N)

    cost = pl.CostEstimate(
        flops=2 * B * K * N,
        transcendentals=0,
        bytes_accessed=int(B * K * x.dtype.itemsize
                           + K * N * w.dtype.itemsize
                           + N * b.dtype.itemsize
                           + B * N * 4),
    )

    return pl.pallas_call(
        f4_kernel,
        out_shape=jax.ShapeDtypeStruct((B, N), jnp.float32),
        grid_spec=pl.GridSpec(
            grid=grid,
            in_specs=[
                pl.BlockSpec((tb, K), lambda i: (i, 0)),   # x tile (120-wide = full dim)
                pl.BlockSpec((K, N), lambda i: (0, 0)),    # weight, resident in VMEM
                pl.BlockSpec((1, N), lambda i: (0, 0)),    # bias, resident
            ],
            out_specs=pl.BlockSpec((tb, N), lambda i: (i, 0)),  # 84-wide output
        ),
        compiler_params=pltpu.CompilerParams(
            dimension_semantics=("parallel",),
        ),
        cost_estimate=cost,
    )(x, w, b2d)


def init_params(key, in_features=IN_FEATURES, out_features=OUT_FEATURES):
    # Deterministic init mimicking PyTorch nn.Linear defaults:
    # weight/bias ~ U(-1/sqrt(fan_in), 1/sqrt(fan_in)).
    kw, kb = jax.random.split(key)
    bound = 1.0 / jnp.sqrt(jnp.float32(in_features))
    # Stored as (in, out) so the kernel does x @ w directly
    # (PyTorch stores (out, in) and does x @ w.T — semantics identical).
    w = jax.random.uniform(kw, (in_features, out_features), jnp.float32,
                           minval=-bound, maxval=bound)
    b = jax.random.uniform(kb, (out_features,), jnp.float32,
                           minval=-bound, maxval=bound)
    return w, b


def reference_forward(x, w, b):
    return jnp.maximum(x.astype(jnp.float32) @ w.astype(jnp.float32) + b[None, :], 0.0)


if __name__ == "__main__":
    key = jax.random.PRNGKey(0)
    kx, kp = jax.random.split(key)

    w, b = init_params(kp)

    # Small demo batch (single partial block).
    batch = 2
    x = jax.random.normal(kx, (batch, IN_FEATURES), jnp.float32)
    out = jax.block_until_ready(f4_forward(x, w, b))
    ref = reference_forward(x, w, b)
    assert out.shape == (batch, OUT_FEATURES), out.shape
    assert jnp.allclose(out, ref, atol=1e-5, rtol=1e-5), \
        float(jnp.max(jnp.abs(out - ref)))

    # Multi-tile path with a ragged last block (B not a multiple of the tile).
    batch2 = 1500
    x2 = jax.random.normal(kx, (batch2, IN_FEATURES), jnp.float32)
    out2 = jax.block_until_ready(f4_forward(x2, w, b, block_b=512))
    ref2 = reference_forward(x2, w, b)
    assert out2.shape == (batch2, OUT_FEATURES), out2.shape
    assert jnp.allclose(out2, ref2, atol=1e-5, rtol=1e-5), \
        float(jnp.max(jnp.abs(out2 - ref2)))

    # bf16 activation/weight path (f32 accumulation in the MXU).
    x_bf = x2.astype(jnp.bfloat16)
    w_bf = w.astype(jnp.bfloat16)
    out3 = jax.block_until_ready(f4_forward(x_bf, w_bf, b, block_b=512))
    ref3 = reference_forward(x_bf, w_bf, b)
    assert out3.shape == (batch2, OUT_FEATURES), out3.shape
    assert jnp.allclose(out3, ref3, atol=1e-2, rtol=1e-2), \
        float(jnp.max(jnp.abs(out3 - ref3)))

    print("KERNEL_OK")
</pallas_src>

<mosaic_0001>
module attributes {stable_mosaic.version = 11 : i64} {
  func.func @f4_kernel(%arg0: i32, %arg1: memref<8x120xf32, #tpu.memory_space<vmem>>, %arg2: memref<120x84xf32, #tpu.memory_space<vmem>>, %arg3: memref<1x84xf32, #tpu.memory_space<vmem>>, %arg4: memref<8x84xf32, #tpu.memory_space<vmem>>) attributes {dimension_semantics = [#tpu.dimension_semantics<parallel>], iteration_bounds = array<i64: 1>, scalar_prefetch = 0 : i64, scratch_operands = 0 : i64, tpu.core_type = #tpu.core_type<tc>, window_params = [{transform_indices = @transform_0, window_bounds = array<i64: 8, 120>}, {pipeline_mode = #tpu.pipeline_mode<synchronous>, transform_indices = @transform_1, window_bounds = array<i64: 120, 84>}, {pipeline_mode = #tpu.pipeline_mode<synchronous>, transform_indices = @transform_2, window_bounds = array<i64: 1, 84>}, {transform_indices = @transform_3, window_bounds = array<i64: 8, 84>}]} {
    %c0 = arith.constant 0 : index
    %c0_0 = arith.constant 0 : index
    %0 = vector.load %arg1[%c0, %c0_0] : memref<8x120xf32, #tpu.memory_space<vmem>>, vector<8x120xf32>
    %c0_1 = arith.constant 0 : index
    %c0_2 = arith.constant 0 : index
    %1 = vector.load %arg2[%c0_1, %c0_2] : memref<120x84xf32, #tpu.memory_space<vmem>>, vector<120x84xf32>
    %cst = arith.constant dense<0.000000e+00> : vector<8x84xf32>
    %2 = tpu.matmul %0, %1, %cst {dimension_numbers = #tpu.dot_dimension_numbers<[1], [0], [0], [1], [0, 0, 1, 1], [], []>} : vector<8x120xf32>, vector<120x84xf32>, vector<8x84xf32> -> vector<8x84xf32>
    %c0_3 = arith.constant 0 : index
    %c0_4 = arith.constant 0 : index
    %3 = vector.load %arg3[%c0_3, %c0_4] : memref<1x84xf32, #tpu.memory_space<vmem>>, vector<1x84xf32>
    %4 = vector.broadcast %3 : vector<1x84xf32> to vector<8x84xf32>
    %5 = arith.addf %2, %4 : vector<8x84xf32>
    %cst_5 = arith.constant 0.000000e+00 : f32
    %6 = vector.broadcast %cst_5 : f32 to vector<8x84xf32>
    %7 = arith.maximumf %5, %6 : vector<8x84xf32>
    %c0_6 = arith.constant 0 : index
    %c0_7 = arith.constant 0 : index
    %8 = vector.load %arg4[%c0_6, %c0_7] : memref<8x84xf32, #tpu.memory_space<vmem>>, vector<8x84xf32>
    tpu.vector_store %arg4[%c0_6, %c0_7], %7 {strides = array<i32>} : memref<8x84xf32, #tpu.memory_space<vmem>>, vector<8x84xf32>,
    return
  }
  func.func @transform_0(%arg0: i32) -> (i32, i32) {
    %c0_i32 = arith.constant 0 : i32
    %c0_i32_0 = arith.constant 0 : i32
    return %arg0, %c0_i32 : i32, i32
  }
  func.func @transform_1(%arg0: i32) -> (i32, i32) {
    %c0_i32 = arith.constant 0 : i32
    %c0_i32_0 = arith.constant 0 : i32
    %c0_i32_1 = arith.constant 0 : i32
    return %c0_i32, %c0_i32_0 : i32, i32
  }
  func.func @transform_2(%arg0: i32) -> (i32, i32) {
    %c0_i32 = arith.constant 0 : i32
    %c0_i32_0 = arith.constant 0 : i32
    %c0_i32_1 = arith.constant 0 : i32
    return %c0_i32, %c0_i32_0 : i32, i32
  }
  func.func @transform_3(%arg0: i32) -> (i32, i32) {
    %c0_i32 = arith.constant 0 : i32
    %c0_i32_0 = arith.constant 0 : i32
    return %arg0, %c0_i32 : i32, i32
  }
}

</mosaic_0001>

<llo_original>
// kernel: tpu_custom_call.1
$region0: #{tpu_custom_call.1}
  #allocation0 [shape = 'u32[]', space=smem, size = 0x4, offset = 0x4, fixed_abs, tag = 'smem constant byte address 0x4 - core index']
  #allocation1 [shape = 'u32[144,128]{1,0:T(1,128)}', space=vmem, size = 0x12000, scoped, tag = 'internal scratch']
  %s0 = inlined_call_operand.vmem [shape: f32[2,120], index: 0, kind: input, shape index: {}]
  %s1 = inlined_call_operand.vmem [shape: f32[120,84], index: 1, kind: input, shape index: {}]
  %s2 = inlined_call_operand.vmem [shape: f32[1,84], index: 2, kind: input, shape index: {}]
  %s3 = inlined_call_operand.hbm [shape: f32[2,84], index: 3, kind: output, shape index: {}]
  %s4 = sld [smem:[#allocation0]]
  $region22: #{tpu_custom_call.1} parent=0
    _
  %s6 = ssub.s32 1, %s4
  %s7 = scalar_select 0, %s6, %s4
  $region1: #{tpu_custom_call.1} parent=0
    #allocation2 [shape = 'u8[4096]{0}', space=vmem, size = 0x1000, scoped, tag = 'output window, operand 0, single buffered']
    #allocation3 [shape = 's32[1]{0}', space=sflag, size = 0x4, scoped, tag = 'scoped memory for tpu_custom_call.1']
    %8 = vsyncpa [#allocation3], 0
    // Predicated region
    $region2: #{tpu_custom_call.1} parent=1 // pred_check
      _
    $region3: #{tpu_custom_call.1} parent=1 // pred_check_branch
      %10 = sbr.rel (0) target = $region5
    $region4: #{tpu_custom_call.1} parent=1 // pred_region
      _
    $region5: #{tpu_custom_call.1} parent=1 // pred_fallthru
      _
    // Predicated region
    $region6: #{tpu_custom_call.1} parent=1 // pred_check
      _
    $region7: #{tpu_custom_call.1} parent=1 // pred_check_branch
      %12 = sbr.rel (0) target = $region9
    $region8: #{tpu_custom_call.1} parent=1 // pred_region
      _
    $region9: #{tpu_custom_call.1} parent=1 // pred_fallthru
      _
    // Predicated region
    $region10: #{tpu_custom_call.1} parent=1 // pred_check
      _
    $region11: #{tpu_custom_call.1} parent=1 // pred_check_branch
      %14 = sbr.rel (0) target = $region13
    $region12: #{tpu_custom_call.1} parent=1 // pred_region
      _
    $region13: #{tpu_custom_call.1} parent=1 // pred_fallthru
      _
    %v15 = vld [vmem:[%s0] sm:$0xff]
    %v16 = vld [vmem:[%s1] sm:$0xff]
    %v17 = vld [vmem:[%s1 + $0x8] sm:$0xff]
    %v18 = vld [vmem:[%s1 + $0x10] sm:$0xff]
    %v19 = vld [vmem:[%s1 + $0x18] sm:$0xff]
    %v20 = vld [vmem:[%s1 + $0x20] sm:$0xff]
    %v21 = vld [vmem:[%s1 + $0x28] sm:$0xff]
    %v22 = vld [vmem:[%s1 + $0x30] sm:$0xff]
    %v23 = vld [vmem:[%s1 + $0x38] sm:$0xff]
    %v24 = vld [vmem:[%s1 + $0x40] sm:$0xff]
    %v25 = vld [vmem:[%s1 + $0x48] sm:$0xff]
    %v26 = vld [vmem:[%s1 + $0x50] sm:$0xff]
    %v27 = vld [vmem:[%s1 + $0x58] sm:$0xff]
    %v28 = vld [vmem:[%s1 + $0x60] sm:$0xff]
    %v29 = vld [vmem:[%s1 + $0x68] sm:$0xff]
    %v30 = vld [vmem:[%s1 + $0x70] sm:$0xff]
    %v31 = vld [vmem:[%s2] sm:$0x1]
    %v33 = vlaneseq
    %v34 = vshrl.u32 %v33, 7
    %v35 = vsub.s32 0, %v34
    %v36 = vrot.slane %v31, %v35
    %vm38 = vcmask 982016
    %v40 = vsel %vm38, %v15, 0
    %42 = vmatprep.subr.mxu0 0.0
    %43 = vmatpush1.msra.mxu0 0.0
    %44 = vmatprep.subr.mxu0 0.0
    %45 = vmatpush1.msra.mxu0 %v30
    %46 = vmatprep.subr.mxu0 0.0
    %47 = vmatpush1.msra.mxu0 %v29
    %48 = vmatprep.subr.mxu0 0.0
    %49 = vmatpush1.msra.mxu0 %v28
    %50 = vmatprep.subr.mxu0 0.0
    %51 = vmatpush1.msra.mxu0 %v27
    %52 = vmatprep.subr.mxu0 0.0
    %53 = vmatpush1.msra.mxu0 %v26
    %54 = vmatprep.subr.mxu0 0.0
    %55 = vmatpush1.msra.mxu0 %v25
    %56 = vmatprep.subr.mxu0 0.0
    %57 = vmatpush1.msra.mxu0 %v24
    %58 = vmatprep.subr.mxu0 0.0
    %59 = vmatpush1.msra.mxu0 %v23
    %60 = vmatprep.subr.mxu0 0.0
    %61 = vmatpush1.msra.mxu0 %v22
    %62 = vmatprep.subr.mxu0 0.0
    %63 = vmatpush1.msra.mxu0 %v21
    %64 = vmatprep.subr.mxu0 0.0
    %65 = vmatpush1.msra.mxu0 %v20
    %66 = vmatprep.subr.mxu0 0.0
    %67 = vmatpush1.msra.mxu0 %v19
    %68 = vmatprep.subr.mxu0 0.0
    %69 = vmatpush1.msra.mxu0 %v18
    %70 = vmatprep.subr.mxu0 0.0
    %71 = vmatpush1.msra.mxu0 %v17
    %72 = vmatprep.subr.mxu0 0.0
    %73 = vmatpush1.msra.mxu0 %v16
    %74 = vmatprep.subr.mxu0 0.0
    %75 = vmatpush2.msra.mxu0 0.0
    %76 = vmatprep.subr.mxu0 0.0
    %77 = vmatpush2.msra.mxu0 0.0
    %78 = vmatprep.subr.mxu0 0.0
    %79 = vmatpush2.msra.mxu0 0.0
    %80 = vmatprep.subr.mxu0 0.0
    %81 = vmatpush2.msra.mxu0 0.0
    %82 = vmatprep.subr.mxu0 0.0
    %83 = vmatpush2.msra.mxu0 0.0
    %84 = vmatprep.subr.mxu0 0.0
    %85 = vmatpush2.msra.mxu0 0.0
    %86 = vmatprep.subr.mxu0 0.0
    %87 = vmatpush2.msra.mxu0 0.0
    %88 = vmatprep.subr.mxu0 0.0
    %89 = vmatpush2.msra.mxu0 0.0
    %90 = vmatprep.subr.mxu0 0.0
    %91 = vmatpush2.msra.mxu0 0.0
    %92 = vmatprep.subr.mxu0 0.0
    %93 = vmatpush2.msra.mxu0 0.0
    %94 = vmatprep.subr.mxu0 0.0
    %95 = vmatpush2.msra.mxu0 0.0
    %96 = vmatprep.subr.mxu0 0.0
    %97 = vmatpush2.msra.mxu0 0.0
    %98 = vmatprep.subr.mxu0 0.0
    %99 = vmatpush2.msra.mxu0 0.0
    %100 = vmatprep.subr.mxu0 0.0
    %101 = vmatpush2.msra.mxu0 0.0
    %102 = vmatprep.subr.mxu0 0.0
    %103 = vmatpush2.msra.mxu0 0.0
    %104 = vmatprep.subr.mxu0 0.0
    %105 = vmatpush2.msra.mxu0 0.0
    %106 = vmatprep.mubr.f32.mxu0 0.0
    %107 = vmatmul.mubr.f32.gmra.mxu0 %v40
    %v108 = vpop.f32.mrf.mxu0
    %v109 = vadd.f32 %v36, %v108
    %v110 = vpop.f32.mrf.mxu0
    %111 = vdwg.mxu0
    %v112 = vmax.f32 %v109, 0.0
    %vm113 = vcmask 687104
    %114 = vst.msk [vmem:[#allocation2] sm:$0xff] %vm113, %v112
    // Predicated region
    $region14: #{tpu_custom_call.1} parent=1 // pred_check
      _
    $region15: #{tpu_custom_call.1} parent=1 // pred_check_branch
      %116 = sbr.rel (0) target = $region17
    $region16: #{tpu_custom_call.1} parent=1 // pred_region
      %s118 = ssub.s32 128, 32
      %119 = vsyncadd [#allocation3], %s118
      %s120 = sshll.u32 [#allocation2], 4
      %s121 = int_to_ptr.vmem [resolvable:$true] %s120
      %126 = dma.vmem_to_hbm [thread:$0]  %s121, 32, %s3, [#allocation3], 32, 32, 2
    $region17: #{tpu_custom_call.1} parent=1 // pred_fallthru
      _
    // Predicated region
    $region18: #{tpu_custom_call.1} parent=1 // pred_check
      _
    $region19: #{tpu_custom_call.1} parent=1 // pred_check_branch
      %128 = sbr.rel (0) target = $region21
    $region20: #{tpu_custom_call.1} parent=1 // pred_region
      %129 = dma.done [#allocation3], 128
    $region21: #{tpu_custom_call.1} parent=1 // pred_fallthru
      _
    %130 = vsyncpa [#allocation3], 1

</llo_original>
